<compile_context>
chip_gen: v5e
topology: v5e:2x2
jax: 0.10.0
libtpu: 0.0.40
codegen_flags: <defaults>
</compile_context>

<pallas_src>
import functools

import jax
import jax.numpy as jnp
from jax.experimental import pallas as pl
from jax.experimental.pallas import tpu as pltpu


def actor_kernel(x_ref, w1_ref, w2_ref, wh_ref, b_ref, out_ref, *, out_dim):
    H = w1_ref.shape[1]
    head_cols = wh_ref.shape[1]        # padded head width (multiple of 128)

    x = x_ref[...]                     # (tb, F) float32

    # Packed biases: [b1 (H) | b2 (H) | head bias (head_cols, zero-padded)]
    b1 = b_ref[:, 0:H]
    b2 = b_ref[:, H:2 * H]
    bh = b_ref[:, 2 * H:2 * H + head_cols]

    # bf16 operands into the MXU, f32 accumulation, f32 activation math.
    h1 = jnp.tanh(
        jnp.dot(x.astype(jnp.bfloat16), w1_ref[...],
                preferred_element_type=jnp.float32) + b1)
    h2 = jnp.tanh(
        jnp.dot(h1.astype(jnp.bfloat16), w2_ref[...],
                preferred_element_type=jnp.float32) + b2)

    # Fused, lane-padded head: cols [0:out_dim] = mean,
    # [out_dim:2*out_dim] = log_std, rest = zero padding (discarded outside).
    head = jnp.dot(h2.astype(jnp.bfloat16), wh_ref[...],
                   preferred_element_type=jnp.float32) + bh   # (tb, head_cols)

    std = jnp.exp(jnp.clip(head, -20.0, 2.0))
    col = jax.lax.broadcasted_iota(jnp.int32, head.shape, 1)
    out_ref[...] = jnp.where(col >= out_dim, std, head).astype(out_ref.dtype)


def actor_forward(x, params, *, out_dim, block_b=512):
    """x: (B, input_dim) float32 -> (mean, std), each (B, out_dim)."""
    w1, w2, wh, bias = params
    B, F = x.shape
    H = w1.shape[1]
    head_cols = wh.shape[1]
    blen = bias.shape[1]

    tb = B if B <= block_b else block_b
    grid = (pl.cdiv(B, tb),)

    kernel = functools.partial(actor_kernel, out_dim=out_dim)

    fused = pl.pallas_call(
        kernel,
        out_shape=jax.ShapeDtypeStruct((B, head_cols), jnp.float32),
        grid=grid,
        in_specs=[
            pl.BlockSpec((tb, F), lambda i: (i, 0)),          # x: tiled over batch
            pl.BlockSpec((F, H), lambda i: (0, 0)),           # W1: resident
            pl.BlockSpec((H, H), lambda i: (0, 0)),           # W2: resident
            pl.BlockSpec((H, head_cols), lambda i: (0, 0)),   # fused head weights
            pl.BlockSpec((1, blen), lambda i: (0, 0)),        # packed biases
        ],
        out_specs=pl.BlockSpec((tb, head_cols), lambda i: (i, 0)),
        compiler_params=pltpu.CompilerParams(
            dimension_semantics=("parallel",)),
    )(x, w1, w2, wh, bias)

    return fused[:, :out_dim], fused[:, out_dim:2 * out_dim]


def init_raw_params(key, input_dim, hidden, output_dim):
    """PyTorch-style uniform(-1/sqrt(fan_in), 1/sqrt(fan_in)) init.
    Weights stored as (in_features, out_features)."""
    def linear(k, fan_in, fan_out):
        kw, kb = jax.random.split(k)
        bound = 1.0 / (fan_in ** 0.5)
        w = jax.random.uniform(kw, (fan_in, fan_out), jnp.float32, -bound, bound)
        b = jax.random.uniform(kb, (fan_out,), jnp.float32, -bound, bound)
        return w, b

    k1, k2, k3, k4 = jax.random.split(key, 4)
    w1, b1 = linear(k1, input_dim, hidden)
    w2, b2 = linear(k2, hidden, hidden)
    w3, b3 = linear(k3, hidden, output_dim)
    wl, bl = linear(k4, hidden, output_dim)
    return (w1, b1, w2, b2, w3, b3, wl, bl)


def pack_params(w1, b1, w2, b2, w3, b3, wl, bl, *, lane=128):
    """Fuse + lane-pad the two heads and pack biases.
    Weights -> bf16, biases -> f32."""
    H = w1.shape[1]
    out_dim = w3.shape[1]
    out2 = 2 * out_dim
    head_cols = max(lane, ((out2 + lane - 1) // lane) * lane)

    wh = jnp.zeros((H, head_cols), jnp.float32)
    wh = wh.at[:, :out_dim].set(w3).at[:, out_dim:out2].set(wl)
    bh = jnp.zeros((head_cols,), jnp.float32)
    bh = bh.at[:out_dim].set(b3).at[out_dim:out2].set(bl)

    bias = jnp.concatenate([b1, b2, bh], axis=0)[None, :]  # (1, 2H + head_cols)
    return (w1.astype(jnp.bfloat16),
            w2.astype(jnp.bfloat16),
            wh.astype(jnp.bfloat16),
            bias.astype(jnp.float32))


def actor_reference_packed(x, params, out_dim):
    """Pure-JAX reference with identical (bf16-weight, fused-head) numerics."""
    w1, w2, wh, bias = params
    H = w1.shape[1]
    head_cols = wh.shape[1]
    b1, b2, bh = bias[:, :H], bias[:, H:2 * H], bias[:, 2 * H:2 * H + head_cols]
    h1 = jnp.tanh(jnp.dot(x.astype(jnp.bfloat16), w1,
                          preferred_element_type=jnp.float32) + b1)
    h2 = jnp.tanh(jnp.dot(h1.astype(jnp.bfloat16), w2,
                          preferred_element_type=jnp.float32) + b2)
    head = jnp.dot(h2.astype(jnp.bfloat16), wh,
                   preferred_element_type=jnp.float32) + bh
    mean = head[:, :out_dim]
    std = jnp.exp(jnp.clip(head[:, out_dim:2 * out_dim], -20.0, 2.0))
    return mean, std


def actor_reference_f32(x, raw):
    """Full-precision reference matching the original PyTorch module."""
    w1, b1, w2, b2, w3, b3, wl, bl = raw
    h1 = jnp.tanh(x @ w1 + b1)
    h2 = jnp.tanh(h1 @ w2 + b2)
    mean = h2 @ w3 + b3
    log_std = jnp.clip(h2 @ wl + bl, -20.0, 2.0)
    return mean, jnp.exp(log_std)


if __name__ == "__main__":
    # LunarLanderContinuous-v2: observation dim 8, action dim 2.
    input_dim, hidden, output_dim = 8, 256, 2
    batch = 4

    key = jax.random.PRNGKey(0)
    kx, kp, kb = jax.random.split(key, 3)
    x = jax.random.normal(kx, (batch, input_dim), jnp.float32)

    raw = init_raw_params(kp, input_dim, hidden, output_dim)
    params = pack_params(*raw)

    fwd = jax.jit(functools.partial(actor_forward, out_dim=output_dim))
    mean, std = fwd(x, params)
    jax.block_until_ready((mean, std))

    assert mean.shape == (batch, output_dim) and std.shape == (batch, output_dim)

    # Matched-precision check (same bf16 weights, fused padded head).
    mean_bf, std_bf = actor_reference_packed(x, params, output_dim)
    assert jnp.allclose(mean, mean_bf, atol=1e-2, rtol=1e-2)
    assert jnp.allclose(std, std_bf, atol=1e-2, rtol=1e-2)

    # Semantic check against the original float32 module math.
    mean_f32, std_f32 = actor_reference_f32(x, raw)
    assert jnp.allclose(mean, mean_f32, atol=5e-2, rtol=5e-2)
    assert jnp.allclose(std, std_f32, atol=5e-2, rtol=5e-2)
    assert bool(jnp.all(std > 0.0))

    # Batched path: exercises the batch grid (grid=(2,), block 512) with
    # resident weight blocks and "parallel" batch-axis semantics.
    xb = jax.random.normal(kb, (1024, input_dim), jnp.float32)
    mean_b, std_b = fwd(xb, params)
    jax.block_until_ready((mean_b, std_b))
    mb_ref, sb_ref = actor_reference_packed(xb, params, output_dim)
    assert jnp.allclose(mean_b, mb_ref, atol=1e-2, rtol=1e-2)
    assert jnp.allclose(std_b, sb_ref, atol=1e-2, rtol=1e-2)

    # TODO(synk): Actor.sample / get_action (Normal rsample, tanh squash,
    # log_prob correction) are host-side sampling utilities and are left
    # outside the kernel.
    print("KERNEL_OK")
</pallas_src>

<mosaic_0001>
module attributes {stable_mosaic.version = 11 : i64} {
  func.func @actor_kernel(%arg0: i32, %arg1: memref<4x8xf32, #tpu.memory_space<vmem>>, %arg2: memref<8x256xbf16, #tpu.memory_space<vmem>>, %arg3: memref<256x256xbf16, #tpu.memory_space<vmem>>, %arg4: memref<256x128xbf16, #tpu.memory_space<vmem>>, %arg5: memref<1x640xf32, #tpu.memory_space<vmem>>, %arg6: memref<4x128xf32, #tpu.memory_space<vmem>>) attributes {dimension_semantics = [#tpu.dimension_semantics<parallel>], iteration_bounds = array<i64: 1>, scalar_prefetch = 0 : i64, scratch_operands = 0 : i64, tpu.core_type = #tpu.core_type<tc>, window_params = [{transform_indices = @transform_0, window_bounds = array<i64: 4, 8>}, {pipeline_mode = #tpu.pipeline_mode<synchronous>, transform_indices = @transform_1, window_bounds = array<i64: 8, 256>}, {pipeline_mode = #tpu.pipeline_mode<synchronous>, transform_indices = @transform_2, window_bounds = array<i64: 256, 256>}, {pipeline_mode = #tpu.pipeline_mode<synchronous>, transform_indices = @transform_3, window_bounds = array<i64: 256, 128>}, {pipeline_mode = #tpu.pipeline_mode<synchronous>, transform_indices = @transform_4, window_bounds = array<i64: 1, 640>}, {transform_indices = @transform_5, window_bounds = array<i64: 4, 128>}]} {
    %c0 = arith.constant 0 : index
    %c0_0 = arith.constant 0 : index
    %0 = vector.load %arg1[%c0, %c0_0] : memref<4x8xf32, #tpu.memory_space<vmem>>, vector<4x8xf32>
    %c0_1 = arith.constant 0 : index
    %c0_2 = arith.constant 0 : index
    %1 = vector.load %arg5[%c0_1, %c0_2] : memref<1x640xf32, #tpu.memory_space<vmem>>, vector<1x256xf32>
    %c0_3 = arith.constant 0 : index
    %c256 = arith.constant 256 : index
    %2 = vector.load %arg5[%c0_3, %c256] : memref<1x640xf32, #tpu.memory_space<vmem>>, vector<1x256xf32>
    %c0_4 = arith.constant 0 : index
    %c512 = arith.constant 512 : index
    %3 = vector.load %arg5[%c0_4, %c512] : memref<1x640xf32, #tpu.memory_space<vmem>>, vector<1x128xf32>
    %4 = arith.truncf %0 : vector<4x8xf32> to vector<4x8xbf16>
    %c0_5 = arith.constant 0 : index
    %c0_6 = arith.constant 0 : index
    %5 = vector.load %arg2[%c0_5, %c0_6] : memref<8x256xbf16, #tpu.memory_space<vmem>>, vector<8x256xbf16>
    %cst = arith.constant dense<0.000000e+00> : vector<4x256xf32>
    %6 = tpu.matmul %4, %5, %cst {dimension_numbers = #tpu.dot_dimension_numbers<[1], [0], [0], [1], [0, 0, 1, 1], [], []>} : vector<4x8xbf16>, vector<8x256xbf16>, vector<4x256xf32> -> vector<4x256xf32>
    %7 = vector.broadcast %1 : vector<1x256xf32> to vector<4x256xf32>
    %8 = arith.addf %6, %7 : vector<4x256xf32>
    %9 = math.tanh %8 : vector<4x256xf32>
    %10 = arith.truncf %9 : vector<4x256xf32> to vector<4x256xbf16>
    %c0_7 = arith.constant 0 : index
    %c0_8 = arith.constant 0 : index
    %11 = vector.load %arg3[%c0_7, %c0_8] : memref<256x256xbf16, #tpu.memory_space<vmem>>, vector<256x256xbf16>
    %cst_9 = arith.constant dense<0.000000e+00> : vector<4x256xf32>
    %12 = tpu.matmul %10, %11, %cst_9 {dimension_numbers = #tpu.dot_dimension_numbers<[1], [0], [0], [1], [0, 0, 1, 1], [], []>} : vector<4x256xbf16>, vector<256x256xbf16>, vector<4x256xf32> -> vector<4x256xf32>
    %13 = vector.broadcast %2 : vector<1x256xf32> to vector<4x256xf32>
    %14 = arith.addf %12, %13 : vector<4x256xf32>
    %15 = math.tanh %14 : vector<4x256xf32>
    %16 = arith.truncf %15 : vector<4x256xf32> to vector<4x256xbf16>
    %c0_10 = arith.constant 0 : index
    %c0_11 = arith.constant 0 : index
    %17 = vector.load %arg4[%c0_10, %c0_11] : memref<256x128xbf16, #tpu.memory_space<vmem>>, vector<256x128xbf16>
    %cst_12 = arith.constant dense<0.000000e+00> : vector<4x128xf32>
    %18 = tpu.matmul %16, %17, %cst_12 {dimension_numbers = #tpu.dot_dimension_numbers<[1], [0], [0], [1], [0, 0, 1, 1], [], []>} : vector<4x256xbf16>, vector<256x128xbf16>, vector<4x128xf32> -> vector<4x128xf32>
    %19 = vector.broadcast %3 : vector<1x128xf32> to vector<4x128xf32>
    %20 = arith.addf %18, %19 : vector<4x128xf32>
    %cst_13 = arith.constant -2.000000e+01 : f32
    %cst_14 = arith.constant 2.000000e+00 : f32
    %21 = vector.broadcast %cst_13 : f32 to vector<4x128xf32>
    %22 = arith.maximumf %21, %20 : vector<4x128xf32>
    %23 = vector.broadcast %cst_14 : f32 to vector<4x128xf32>
    %24 = arith.minimumf %23, %22 : vector<4x128xf32>
    %25 = math.exp %24 : vector<4x128xf32>
    %26 = tpu.iota {dimensions = array<i32: 1>} : vector<4x128xi32>
    %c2_i32 = arith.constant 2 : i32
    %27 = vector.broadcast %c2_i32 : i32 to vector<4x128xi32>
    %28 = arith.cmpi sge, %26, %27 : vector<4x128xi32>
    %29 = arith.select %28, %25, %20 : vector<4x128xi1>, vector<4x128xf32>
    %c0_15 = arith.constant 0 : index
    %c0_16 = arith.constant 0 : index
    %30 = vector.load %arg6[%c0_15, %c0_16] : memref<4x128xf32, #tpu.memory_space<vmem>>, vector<4x128xf32>
    tpu.vector_store %arg6[%c0_15, %c0_16], %29 {strides = array<i32>} : memref<4x128xf32, #tpu.memory_space<vmem>>, vector<4x128xf32>,
    return
  }
  func.func @transform_0(%arg0: i32) -> (i32, i32) {
    %c0_i32 = arith.constant 0 : i32
    %c0_i32_0 = arith.constant 0 : i32
    return %arg0, %c0_i32 : i32, i32
  }
  func.func @transform_1(%arg0: i32) -> (i32, i32) {
    %c0_i32 = arith.constant 0 : i32
    %c0_i32_0 = arith.constant 0 : i32
    %c0_i32_1 = arith.constant 0 : i32
    return %c0_i32, %c0_i32_0 : i32, i32
  }
  func.func @transform_2(%arg0: i32) -> (i32, i32) {
    %c0_i32 = arith.constant 0 : i32
    %c0_i32_0 = arith.constant 0 : i32
    %c0_i32_1 = arith.constant 0 : i32
    return %c0_i32, %c0_i32_0 : i32, i32
  }
  func.func @transform_3(%arg0: i32) -> (i32, i32) {
    %c0_i32 = arith.constant 0 : i32
    %c0_i32_0 = arith.constant 0 : i32
    %c0_i32_1 = arith.constant 0 : i32
    return %c0_i32, %c0_i32_0 : i32, i32
  }
  func.func @transform_4(%arg0: i32) -> (i32, i32) {
    %c0_i32 = arith.constant 0 : i32
    %c0_i32_0 = arith.constant 0 : i32
    %c0_i32_1 = arith.constant 0 : i32
    return %c0_i32, %c0_i32_0 : i32, i32
  }
  func.func @transform_5(%arg0: i32) -> (i32, i32) {
    %c0_i32 = arith.constant 0 : i32
    %c0_i32_0 = arith.constant 0 : i32
    return %arg0, %c0_i32 : i32, i32
  }
}

</mosaic_0001>

<llo_original>
// kernel: actor_forward.1
$region0: #{actor_forward.1}
  #allocation0 [shape = 'u32[]', space=smem, size = 0x4, offset = 0x4, fixed_abs, tag = 'smem constant byte address 0x4 - core index']
  #allocation1 [shape = 'u32[72,128]{1,0:T(1,128)}', space=vmem, size = 0x9000, scoped, tag = 'internal scratch']
  %s0 = inlined_call_operand.hbm [shape: f32[4,8], index: 0, kind: input, shape index: {}]
  %s1 = inlined_call_operand.hbm [shape: bf16[8,256], index: 1, kind: input, shape index: {}]
  %s2 = inlined_call_operand.hbm [shape: bf16[256,256], index: 2, kind: input, shape index: {}]
  %s3 = inlined_call_operand.hbm [shape: bf16[256,128], index: 3, kind: input, shape index: {}]
  %s4 = inlined_call_operand.hbm [shape: f32[1,640], index: 4, kind: input, shape index: {}]
  %s5 = inlined_call_operand.vmem [shape: f32[4,128], index: 5, kind: output, shape index: {}]
  %s6 = sld [smem:[#allocation0]]
  $region50: #{actor_forward.1} parent=0
    _
  %s8 = ssub.s32 1, %s6
  %s9 = scalar_select 0, %s8, %s6
  $region1: #{actor_forward.1} parent=0
    #allocation2 [shape = 'u8[2048]{0}', space=vmem, size = 0x800, scoped, tag = 'input window, operand 0, single buffered']
    #allocation3 [shape = 's32[1]{0}', space=sflag, size = 0x4, scoped, tag = 'scoped memory for actor_forward.1']
    #allocation4 [shape = 'u8[4096]{0}', space=vmem, size = 0x1000, scoped, tag = 'input window, operand 1, single buffered']
    #allocation5 [shape = 's32[1]{0}', space=sflag, size = 0x4, scoped, tag = 'scoped memory for actor_forward.1']
    #allocation6 [shape = 'u8[131072]{0}', space=vmem, size = 0x20000, scoped, tag = 'input window, operand 2, single buffered']
    #allocation7 [shape = 'u8[65536]{0}', space=vmem, size = 0x10000, scoped, tag = 'input window, operand 3, single buffered']
    #allocation8 [shape = 's32[1]{0}', space=sflag, size = 0x4, scoped, tag = 'scoped memory for actor_forward.1']
    #allocation9 [shape = 'u8[2560]{0}', space=vmem, size = 0xc00, scoped, tag = 'input window, operand 4, single buffered']
    %10 = vsyncpa [#allocation3], 0
    %11 = vsyncpa [#allocation5], 0
    %12 = vsyncpa [#allocation8], 0
    // Predicated region
    $region2: #{actor_forward.1} parent=1 // pred_check
      _
    $region3: #{actor_forward.1} parent=1 // pred_check_branch
      %14 = sbr.rel (0) target = $region5
    $region4: #{actor_forward.1} parent=1 // pred_region
      %16 = vsyncadd [#allocation3], 0
      %s18 = sshll.u32 %s0, 4
      %s19 = int_to_ptr.hbm [resolvable:$true] %s18
      %s20 = sshll.u32 [#allocation2], 4
      %s21 = int_to_ptr.vmem [resolvable:$true] %s20
      %23 = dma.hbm_to_vmem [thread:$0]  %s19, 64, %s21, [#allocation3]
    $region5: #{actor_forward.1} parent=1 // pred_fallthru
      _
    // Predicated region
    $region6: #{actor_forward.1} parent=1 // pred_check
      _
    $region7: #{actor_forward.1} parent=1 // pred_check_branch
      %25 = sbr.rel (0) target = $region9
    $region8: #{actor_forward.1} parent=1 // pred_region
      %27 = vsyncadd [#allocation5], 0
      %s29 = sshll.u32 %s1, 4
      %s30 = int_to_ptr.hbm [resolvable:$true] %s29
      %s31 = sshll.u32 [#allocation4], 4
      %s32 = int_to_ptr.vmem [resolvable:$true] %s31
      %34 = dma.hbm_to_vmem [thread:$0]  %s30, 128, %s32, [#allocation5]
    $region9: #{actor_forward.1} parent=1 // pred_fallthru
      _
    // Predicated region
    $region10: #{actor_forward.1} parent=1 // pred_check
      _
    $region11: #{actor_forward.1} parent=1 // pred_check_branch
      %36 = sbr.rel (0) target = $region13
    $region12: #{actor_forward.1} parent=1 // pred_region
      %38 = vsyncadd [#allocation5], 0
      %s39 = sshll.u32 %s2, 4
      %s40 = int_to_ptr.hbm [resolvable:$true] %s39
      %s41 = sshll.u32 [#allocation6], 4
      %s42 = int_to_ptr.vmem [resolvable:$true] %s41
      %47 = dma.hbm_to_vmem [thread:$0]  %s40, 4096, %s42, [#allocation5], 128, 128, 8
    $region13: #{actor_forward.1} parent=1 // pred_fallthru
      _
    // Predicated region
    $region14: #{actor_forward.1} parent=1 // pred_check
      _
    $region15: #{actor_forward.1} parent=1 // pred_check_branch
      %49 = sbr.rel (0) target = $region17
    $region16: #{actor_forward.1} parent=1 // pred_region
      %51 = vsyncadd [#allocation8], 0
      %s52 = sshll.u32 %s3, 4
      %s53 = int_to_ptr.hbm [resolvable:$true] %s52
      %s54 = sshll.u32 [#allocation7], 4
      %s55 = int_to_ptr.vmem [resolvable:$true] %s54
      %60 = dma.hbm_to_vmem [thread:$0]  %s53, 2048, %s55, [#allocation8], 64, 64, 4
    $region17: #{actor_forward.1} parent=1 // pred_fallthru
      _
    // Predicated region
    $region18: #{actor_forward.1} parent=1 // pred_check
      _
    $region19: #{actor_forward.1} parent=1 // pred_check_branch
      %62 = sbr.rel (0) target = $region21
    $region20: #{actor_forward.1} parent=1 // pred_region
      %64 = vsyncadd [#allocation8], 0
      %s66 = sshll.u32 %s4, 4
      %s67 = int_to_ptr.hbm [resolvable:$true] %s66
      %s68 = sshll.u32 [#allocation9], 4
      %s69 = int_to_ptr.vmem [resolvable:$true] %s68
      %71 = dma.hbm_to_vmem [thread:$0]  %s67, 80, %s69, [#allocation8]
    $region21: #{actor_forward.1} parent=1 // pred_fallthru
      _
    // Predicated region
    $region22: #{actor_forward.1} parent=1 // pred_check
      _
    $region23: #{actor_forward.1} parent=1 // pred_check_branch
      %73 = sbr.rel (0) target = $region25
    $region24: #{actor_forward.1} parent=1 // pred_region
      %75 = dma.done [#allocation3], 64
    $region25: #{actor_forward.1} parent=1 // pred_fallthru
      _
    // Predicated region
    $region26: #{actor_forward.1} parent=1 // pred_check
      _
    $region27: #{actor_forward.1} parent=1 // pred_check_branch
      %77 = sbr.rel (0) target = $region29
    $region28: #{actor_forward.1} parent=1 // pred_region
      %79 = dma.done [#allocation5], 128
    $region29: #{actor_forward.1} parent=1 // pred_fallthru
      _
    // Predicated region
    $region30: #{actor_forward.1} parent=1 // pred_check
      _
    $region31: #{actor_forward.1} parent=1 // pred_check_branch
      %81 = sbr.rel (0) target = $region33
    $region32: #{actor_forward.1} parent=1 // pred_region
      %83 = dma.done [#allocation5], 4096
    $region33: #{actor_forward.1} parent=1 // pred_fallthru
      _
    // Predicated region
    $region34: #{actor_forward.1} parent=1 // pred_check
      _
    $region35: #{actor_forward.1} parent=1 // pred_check_branch
      %85 = sbr.rel (0) target = $region37
    $region36: #{actor_forward.1} parent=1 // pred_region
      %87 = dma.done [#allocation8], 2048
    $region37: #{actor_forward.1} parent=1 // pred_fallthru
      _
    // Predicated region
    $region38: #{actor_forward.1} parent=1 // pred_check
      _
    $region39: #{actor_forward.1} parent=1 // pred_check_branch
      %89 = sbr.rel (0) target = $region41
    $region40: #{actor_forward.1} parent=1 // pred_region
      %91 = dma.done [#allocation8], 80
    $region41: #{actor_forward.1} parent=1 // pred_fallthru
      _
    %v93 = vld [vmem:[#allocation2] sm:$0xf]
    %v94 = vld [vmem:[#allocation9] sm:$0x3]
    %v95 = vld [vmem:[#allocation9 + $0x2] sm:$0x3]
    %v96 = vld [vmem:[#allocation9 + $0x4] sm:$0x1]
    %v97 = vpack.c.bf16 %v93, %v93
    %v98 = vld [vmem:[#allocation4] sm:$0xff]
    %v100 = vperm.slane %v94, 0
    %v101 = vperm.slane %v94, 1
    %v105 = vunpack.c.l.b16 %v98
    %v106 = vunpack.c.h.b16 %v98
    %v107 = vpack.c.b16 %v105, %v105
    %v108 = vpack.c.b16 %v106, %v106
    %vm109 = vcmask 64512
    %v111 = vsel %vm109, %v97, 0
    %vm113 = vcmask 1043456
    %v115 = vsel %vm113, %v107, 0
    %v118 = vsel %vm113, %v108, 0
    %120 = vmatpush.bf16.msra.mxu0 0
    %121 = vmatpush.bf16.msra.mxu0 0
    %122 = vmatpush.bf16.msra.mxu0 0
    %123 = vmatpush.bf16.msra.mxu0 0
    %124 = vmatpush.bf16.msra.mxu0 0
    %125 = vmatpush.bf16.msra.mxu0 0
    %126 = vmatpush.bf16.msra.mxu0 0
    %127 = vmatpush.bf16.msra.mxu0 %v115
    %128 = vmatmul.bf16.gmra.mxu0 %v111
    %v129 = vpop.f32.mrf.mxu0
    %v130 = vadd.f32 %v100, %v129
    %v131 = vpop.f32.mrf.mxu0
    %132 = vdwg.mxu0
    %133 = vmatpush.bf16.msra.mxu0 0
    %134 = vmatpush.bf16.msra.mxu0 0
    %135 = vmatpush.bf16.msra.mxu0 0
    %136 = vmatpush.bf16.msra.mxu0 0
    %137 = vmatpush.bf16.msra.mxu0 0
    %138 = vmatpush.bf16.msra.mxu0 0
    %139 = vmatpush.bf16.msra.mxu0 0
    %140 = vmatpush.bf16.msra.mxu0 %v118
    %141 = vmatmul.bf16.gmra.mxu0 %v111
    %v142 = vpop.f32.mrf.mxu0
    %v143 = vadd.f32 %v101, %v142
    %v144 = vpop.f32.mrf.mxu0
    %145 = vdwg.mxu0
    %v146 = vtanh.pop %v130
    %v147 = vtanh.pop %v143
    %v148 = vpack.c.bf16 %v146, %v146
    %v149 = vpack.c.bf16 %v147, %v147
    %v150 = vld [vmem:[#allocation6] sm:$0xff]
    %v151 = vld [vmem:[#allocation6 + $0x8] sm:$0xff]
    %v152 = vld [vmem:[#allocation6 + $0x10] sm:$0xff]
    %v153 = vld [vmem:[#allocation6 + $0x18] sm:$0xff]
    %v154 = vld [vmem:[#allocation6 + $0x20] sm:$0xff]
    %v155 = vld [vmem:[#allocation6 + $0x28] sm:$0xff]
    %v156 = vld [vmem:[#allocation6 + $0x30] sm:$0xff]
    %v157 = vld [vmem:[#allocation6 + $0x38] sm:$0xff]
    %v158 = vld [vmem:[#allocation6 + $0x40] sm:$0xff]
    %v159 = vld [vmem:[#allocation6 + $0x48] sm:$0xff]
    %v160 = vld [vmem:[#allocation6 + $0x50] sm:$0xff]
    %v161 = vld [vmem:[#allocation6 + $0x58] sm:$0xff]
    %v162 = vld [vmem:[#allocation6 + $0x60] sm:$0xff]
    %v163 = vld [vmem:[#allocation6 + $0x68] sm:$0xff]
    %v164 = vld [vmem:[#allocation6 + $0x70] sm:$0xff]
    %v165 = vld [vmem:[#allocation6 + $0x78] sm:$0xff]
    %v166 = vld [vmem:[#allocation6 + $0x80] sm:$0xff]
    %v167 = vld [vmem:[#allocation6 + $0x88] sm:$0xff]
    %v168 = vld [vmem:[#allocation6 + $0x90] sm:$0xff]
    %v169 = vld [vmem:[#allocation6 + $0x98] sm:$0xff]
    %v170 = vld [vmem:[#allocation6 + $0xa0] sm:$0xff]
    %v171 = vld [vmem:[#allocation6 + $0xa8] sm:$0xff]
    %v172 = vld [vmem:[#allocation6 + $0xb0] sm:$0xff]
    %v173 = vld [vmem:[#allocation6 + $0xb8] sm:$0xff]
    %v174 = vld [vmem:[#allocation6 + $0xc0] sm:$0xff]
    %v175 = vld [vmem:[#allocation6 + $0xc8] sm:$0xff]
    %v176 = vld [vmem:[#allocation6 + $0xd0] sm:$0xff]
    %v177 = vld [vmem:[#allocation6 + $0xd8] sm:$0xff]
    %v178 = vld [vmem:[#allocation6 + $0xe0] sm:$0xff]
    %v179 = vld [vmem:[#allocation6 + $0xe8] sm:$0xff]
    %v180 = vld [vmem:[#allocation6 + $0xf0] sm:$0xff]
    %v181 = vld [vmem:[#allocation6 + $0xf8] sm:$0xff]
    %v183 = vperm.slane %v95, 0
    %v184 = vperm.slane %v95, 1
    %v219 = vunpack.c.l.b16 %v150
    %v220 = vunpack.c.h.b16 %v150
    %v221 = vunpack.c.l.b16 %v151
    %v222 = vunpack.c.h.b16 %v151
    %v223 = vunpack.c.l.b16 %v152
    %v224 = vunpack.c.h.b16 %v152
    %v225 = vunpack.c.l.b16 %v153
    %v226 = vunpack.c.h.b16 %v153
    %v227 = vunpack.c.l.b16 %v154
    %v228 = vunpack.c.h.b16 %v154
    %v229 = vunpack.c.l.b16 %v155
    %v230 = vunpack.c.h.b16 %v155
    %v231 = vunpack.c.l.b16 %v156
    %v232 = vunpack.c.h.b16 %v156
    %v233 = vunpack.c.l.b16 %v157
    %v234 = vunpack.c.h.b16 %v157
    %v235 = vunpack.c.l.b16 %v158
    %v236 = vunpack.c.h.b16 %v158
    %v237 = vunpack.c.l.b16 %v159
    %v238 = vunpack.c.h.b16 %v159
    %v239 = vunpack.c.l.b16 %v160
    %v240 = vunpack.c.h.b16 %v160
    %v241 = vunpack.c.l.b16 %v161
    %v242 = vunpack.c.h.b16 %v161
    %v243 = vunpack.c.l.b16 %v162
    %v244 = vunpack.c.h.b16 %v162
    %v245 = vunpack.c.l.b16 %v163
    %v246 = vunpack.c.h.b16 %v163
    %v247 = vunpack.c.l.b16 %v164
    %v248 = vunpack.c.h.b16 %v164
    %v249 = vunpack.c.l.b16 %v165
    %v250 = vunpack.c.h.b16 %v165
    %v251 = vunpack.c.l.b16 %v166
    %v252 = vunpack.c.h.b16 %v166
    %v253 = vunpack.c.l.b16 %v167
    %v254 = vunpack.c.h.b16 %v167
    %v255 = vunpack.c.l.b16 %v168
    %v256 = vunpack.c.h.b16 %v168
    %v257 = vunpack.c.l.b16 %v169
    %v258 = vunpack.c.h.b16 %v169
    %v259 = vunpack.c.l.b16 %v170
    %v260 = vunpack.c.h.b16 %v170
    %v261 = vunpack.c.l.b16 %v171
    %v262 = vunpack.c.h.b16 %v171
    %v263 = vunpack.c.l.b16 %v172
    %v264 = vunpack.c.h.b16 %v172
    %v265 = vunpack.c.l.b16 %v173
    %v266 = vunpack.c.h.b16 %v173
    %v267 = vunpack.c.l.b16 %v174
    %v268 = vunpack.c.h.b16 %v174
    %v269 = vunpack.c.l.b16 %v175
    %v270 = vunpack.c.h.b16 %v175
    %v271 = vunpack.c.l.b16 %v176
    %v272 = vunpack.c.h.b16 %v176
    %v273 = vunpack.c.l.b16 %v177
    %v274 = vunpack.c.h.b16 %v177
    %v275 = vunpack.c.l.b16 %v178
    %v276 = vunpack.c.h.b16 %v178
    %v277 = vunpack.c.l.b16 %v179
    %v278 = vunpack.c.h.b16 %v179
    %v279 = vunpack.c.l.b16 %v180
    %v280 = vunpack.c.h.b16 %v180
    %v281 = vunpack.c.l.b16 %v181
    %v282 = vunpack.c.h.b16 %v181
    %v283 = vpack.c.b16 %v221, %v219
    %v284 = vpack.c.b16 %v222, %v220
    %v285 = vpack.c.b16 %v225, %v223
    %v286 = vpack.c.b16 %v226, %v224
    %v287 = vpack.c.b16 %v229, %v227
    %v288 = vpack.c.b16 %v230, %v228
    %v289 = vpack.c.b16 %v233, %v231
    %v290 = vpack.c.b16 %v234, %v232
    %v291 = vpack.c.b16 %v237, %v235
    %v292 = vpack.c.b16 %v238, %v236
    %v293 = vpack.c.b16 %v241, %v239
    %v294 = vpack.c.b16 %v242, %v240
    %v295 = vpack.c.b16 %v245, %v243
    %v296 = vpack.c.b16 %v246, %v244
    %v297 = vpack.c.b16 %v249, %v247
    %v298 = vpack.c.b16 %v250, %v248
    %v299 = vpack.c.b16 %v253, %v251
    %v300 = vpack.c.b16 %v254, %v252
    %v301 = vpack.c.b16 %v257, %v255
    %v302 = vpack.c.b16 %v258, %v256
    %v303 = vpack.c.b16 %v261, %v259
    %v304 = vpack.c.b16 %v262, %v260
    %v305 = vpack.c.b16 %v265, %v263
    %v306 = vpack.c.b16 %v266, %v264
    %v307 = vpack.c.b16 %v269, %v267
    %v308 = vpack.c.b16 %v270, %v268
    %v309 = vpack.c.b16 %v273, %v271
    %v310 = vpack.c.b16 %v274, %v272
    %v311 = vpack.c.b16 %v277, %v275
    %v312 = vpack.c.b16 %v278, %v276
    %v313 = vpack.c.b16 %v281, %v279
    %v314 = vpack.c.b16 %v282, %v280
    %347 = vmatpush.bf16.msra.mxu0 %v297
    %348 = vmatpush.bf16.msra.mxu0 %v295
    %349 = vmatpush.bf16.msra.mxu0 %v293
    %350 = vmatpush.bf16.msra.mxu0 %v291
    %351 = vmatpush.bf16.msra.mxu0 %v289
    %352 = vmatpush.bf16.msra.mxu0 %v287
    %353 = vmatpush.bf16.msra.mxu0 %v285
    %354 = vmatpush.bf16.msra.mxu0 %v283
    %355 = vmatmul.bf16.gmra.mxu0 %v148
    %v356 = vpop.f32.mrf.mxu0
    %v357 = vadd.f32 %v183, %v356
    %v358 = vpop.f32.mrf.mxu0
    %359 = vdwg.mxu0
    %360 = vmatpush.bf16.msra.mxu0 %v313
    %361 = vmatpush.bf16.msra.mxu0 %v311
    %362 = vmatpush.bf16.msra.mxu0 %v309
    %363 = vmatpush.bf16.msra.mxu0 %v307
    %364 = vmatpush.bf16.msra.mxu0 %v305
    %365 = vmatpush.bf16.msra.mxu0 %v303
    %366 = vmatpush.bf16.msra.mxu0 %v301
    %367 = vmatpush.bf16.msra.mxu0 %v299
    %368 = vmatmul.bf16.gmra.mxu0 %v149
    %v369 = vpop.f32.mrf.mxu0
    %v370 = vadd.f32 %v357, %v369
    %v371 = vpop.f32.mrf.mxu0
    %372 = vdwg.mxu0
    %373 = vmatpush.bf16.msra.mxu0 %v298
    %374 = vmatpush.bf16.msra.mxu0 %v296
    %375 = vmatpush.bf16.msra.mxu0 %v294
    %376 = vmatpush.bf16.msra.mxu0 %v292
    %377 = vmatpush.bf16.msra.mxu0 %v290
    %378 = vmatpush.bf16.msra.mxu0 %v288
    %379 = vmatpush.bf16.msra.mxu0 %v286
    %380 = vmatpush.bf16.msra.mxu0 %v284
    %381 = vmatmul.bf16.gmra.mxu0 %v148
    %v382 = vpop.f32.mrf.mxu0
    %v383 = vadd.f32 %v184, %v382
    %v384 = vpop.f32.mrf.mxu0
    %385 = vdwg.mxu0
    %386 = vmatpush.bf16.msra.mxu0 %v314
    %387 = vmatpush.bf16.msra.mxu0 %v312
    %388 = vmatpush.bf16.msra.mxu0 %v310
    %389 = vmatpush.bf16.msra.mxu0 %v308
    %390 = vmatpush.bf16.msra.mxu0 %v306
    %391 = vmatpush.bf16.msra.mxu0 %v304
    %392 = vmatpush.bf16.msra.mxu0 %v302
    %393 = vmatpush.bf16.msra.mxu0 %v300
    %394 = vmatmul.bf16.gmra.mxu0 %v149
    %v395 = vpop.f32.mrf.mxu0
    %v396 = vadd.f32 %v383, %v395
    %v397 = vpop.f32.mrf.mxu0
    %398 = vdwg.mxu0
    %v399 = vtanh.pop %v370
    %v400 = vtanh.pop %v396
    %v401 = vpack.c.bf16 %v399, %v399
    %v402 = vpack.c.bf16 %v400, %v400
    %v403 = vld [vmem:[#allocation7] sm:$0xf]
    %v404 = vld [vmem:[#allocation7 + $0x4] sm:$0xf]
    %v405 = vld [vmem:[#allocation7 + $0x8] sm:$0xf]
    %v406 = vld [vmem:[#allocation7 + $0xc] sm:$0xf]
    %v407 = vld [vmem:[#allocation7 + $0x10] sm:$0xf]
    %v408 = vld [vmem:[#allocation7 + $0x14] sm:$0xf]
    %v409 = vld [vmem:[#allocation7 + $0x18] sm:$0xf]
    %v410 = vld [vmem:[#allocation7 + $0x1c] sm:$0xf]
    %v411 = vld [vmem:[#allocation7 + $0x20] sm:$0xf]
    %v412 = vld [vmem:[#allocation7 + $0x24] sm:$0xf]
    %v413 = vld [vmem:[#allocation7 + $0x28] sm:$0xf]
    %v414 = vld [vmem:[#allocation7 + $0x2c] sm:$0xf]
    %v415 = vld [vmem:[#allocation7 + $0x30] sm:$0xf]
    %v416 = vld [vmem:[#allocation7 + $0x34] sm:$0xf]
    %v417 = vld [vmem:[#allocation7 + $0x38] sm:$0xf]
    %v418 = vld [vmem:[#allocation7 + $0x3c] sm:$0xf]
    %v419 = vld [vmem:[#allocation7 + $0x40] sm:$0xf]
    %v420 = vld [vmem:[#allocation7 + $0x44] sm:$0xf]
    %v421 = vld [vmem:[#allocation7 + $0x48] sm:$0xf]
    %v422 = vld [vmem:[#allocation7 + $0x4c] sm:$0xf]
    %v423 = vld [vmem:[#allocation7 + $0x50] sm:$0xf]
    %v424 = vld [vmem:[#allocation7 + $0x54] sm:$0xf]
    %v425 = vld [vmem:[#allocation7 + $0x58] sm:$0xf]
    %v426 = vld [vmem:[#allocation7 + $0x5c] sm:$0xf]
    %v427 = vld [vmem:[#allocation7 + $0x60] sm:$0xf]
    %v428 = vld [vmem:[#allocation7 + $0x64] sm:$0xf]
    %v429 = vld [vmem:[#allocation7 + $0x68] sm:$0xf]
    %v430 = vld [vmem:[#allocation7 + $0x6c] sm:$0xf]
    %v431 = vld [vmem:[#allocation7 + $0x70] sm:$0xf]
    %v432 = vld [vmem:[#allocation7 + $0x74] sm:$0xf]
    %v433 = vld [vmem:[#allocation7 + $0x78] sm:$0xf]
    %v434 = vld [vmem:[#allocation7 + $0x7c] sm:$0xf]
    %v436 = vperm.slane %v96, 0
    %v470 = vunpack.c.l.b16 %v403
    %v471 = vunpack.c.l.b16 %v404
    %v472 = vunpack.c.l.b16 %v405
    %v473 = vunpack.c.l.b16 %v406
    %v474 = vunpack.c.l.b16 %v407
    %v475 = vunpack.c.l.b16 %v408
    %v476 = vunpack.c.l.b16 %v409
    %v477 = vunpack.c.l.b16 %v410
    %v478 = vunpack.c.l.b16 %v411
    %v479 = vunpack.c.l.b16 %v412
    %v480 = vunpack.c.l.b16 %v413
    %v481 = vunpack.c.l.b16 %v414
    %v482 = vunpack.c.l.b16 %v415
    %v483 = vunpack.c.l.b16 %v416
    %v484 = vunpack.c.l.b16 %v417
    %v485 = vunpack.c.l.b16 %v418
    %v486 = vunpack.c.l.b16 %v419
    %v487 = vunpack.c.l.b16 %v420
    %v488 = vunpack.c.l.b16 %v421
    %v489 = vunpack.c.l.b16 %v422
    %v490 = vunpack.c.l.b16 %v423
    %v491 = vunpack.c.l.b16 %v424
    %v492 = vunpack.c.l.b16 %v425
    %v493 = vunpack.c.l.b16 %v426
    %v494 = vunpack.c.l.b16 %v427
    %v495 = vunpack.c.l.b16 %v428
    %v496 = vunpack.c.l.b16 %v429
    %v497 = vunpack.c.l.b16 %v430
    %v498 = vunpack.c.l.b16 %v431
    %v499 = vunpack.c.l.b16 %v432
    %v500 = vunpack.c.l.b16 %v433
    %v501 = vunpack.c.l.b16 %v434
    %v502 = vpack.c.b16 %v471, %v470
    %v503 = vpack.c.b16 %v473, %v472
    %v504 = vpack.c.b16 %v475, %v474
    %v505 = vpack.c.b16 %v477, %v476
    %v506 = vpack.c.b16 %v479, %v478
    %v507 = vpack.c.b16 %v481, %v480
    %v508 = vpack.c.b16 %v483, %v482
    %v509 = vpack.c.b16 %v485, %v484
    %v510 = vpack.c.b16 %v487, %v486
    %v511 = vpack.c.b16 %v489, %v488
    %v512 = vpack.c.b16 %v491, %v490
    %v513 = vpack.c.b16 %v493, %v492
    %v514 = vpack.c.b16 %v495, %v494
    %v515 = vpack.c.b16 %v497, %v496
    %v516 = vpack.c.b16 %v499, %v498
    %v517 = vpack.c.b16 %v501, %v500
    %534 = vmatpush.bf16.msra.mxu0 %v509
    %535 = vmatpush.bf16.msra.mxu0 %v508
    %536 = vmatpush.bf16.msra.mxu0 %v507
    %537 = vmatpush.bf16.msra.mxu0 %v506
    %538 = vmatpush.bf16.msra.mxu0 %v505
    %539 = vmatpush.bf16.msra.mxu0 %v504
    %540 = vmatpush.bf16.msra.mxu0 %v503
    %541 = vmatpush.bf16.msra.mxu0 %v502
    %542 = vmatmul.bf16.gmra.mxu0 %v401
    %v543 = vpop.f32.mrf.mxu0
    %v544 = vadd.f32 %v436, %v543
    %v545 = vpop.f32.mrf.mxu0
    %546 = vdwg.mxu0
    %547 = vmatpush.bf16.msra.mxu0 %v517
    %548 = vmatpush.bf16.msra.mxu0 %v516
    %549 = vmatpush.bf16.msra.mxu0 %v515
    %550 = vmatpush.bf16.msra.mxu0 %v514
    %551 = vmatpush.bf16.msra.mxu0 %v513
    %552 = vmatpush.bf16.msra.mxu0 %v512
    %553 = vmatpush.bf16.msra.mxu0 %v511
    %554 = vmatpush.bf16.msra.mxu0 %v510
    %555 = vmatmul.bf16.gmra.mxu0 %v402
    %v556 = vpop.f32.mrf.mxu0
    %v557 = vadd.f32 %v544, %v556
    %v558 = vpop.f32.mrf.mxu0
    %559 = vdwg.mxu0
    %v560 = vmax.f32 %v557, -20.0
    %v561 = vmin.f32 %v560, 2.0
    %v562 = vmul.f32 %v561, 1.442695
    %v563 = vpow.pop %v562
    %v564 = vlaneseq
    %v565 = vand.u32 %v564, 127
    %vm566 = vcmp.ge.s32.totalorder %v565, 2
    %v567 = vsel %vm566, %v563, %v557
    %568 = vst [vmem:[%s5] sm:$0xf] %v567
    // Predicated region
    $region42: #{actor_forward.1} parent=1 // pred_check
      _
    $region43: #{actor_forward.1} parent=1 // pred_check_branch
      %570 = sbr.rel (0) target = $region45
    $region44: #{actor_forward.1} parent=1 // pred_region
      _
    $region45: #{actor_forward.1} parent=1 // pred_fallthru
      _
    // Predicated region
    $region46: #{actor_forward.1} parent=1 // pred_check
      _
    $region47: #{actor_forward.1} parent=1 // pred_check_branch
      %572 = sbr.rel (0) target = $region49
    $region48: #{actor_forward.1} parent=1 // pred_region
      _
    $region49: #{actor_forward.1} parent=1 // pred_fallthru
      _
    %573 = vsyncpa [#allocation3], 1
    %574 = vsyncpa [#allocation5], 1
    %575 = vsyncpa [#allocation8], 1

</llo_original>
